<compile_context>
chip_gen: v7x
topology: tpu7x:2x2x1
jax: 0.10.0
libtpu: 0.0.40
codegen_flags: <defaults>
</compile_context>

<pallas_src>
import functools

import jax
import jax.numpy as jnp
from jax.experimental import pallas as pl
from jax.experimental.pallas import tpu as pltpu


def _round_up(v: int, m: int) -> int:
    return (v + m - 1) // m * m


def _sublane(dtype) -> int:
    """Minimum sublane multiple for the dtype (f32:8, bf16:16, int8/fp8:32)."""
    return {4: 8, 2: 16, 1: 32}.get(jnp.dtype(dtype).itemsize, 8)


# ---------------------------------------------------------------------------
# Kernels
# ---------------------------------------------------------------------------
def _linear_fullk_kernel(x_ref, w_ref, b_ref, o_ref):
    """Full reduction (K = D) in one MXU pass; bias + cast fused, no scratch."""
    o_ref[...] = (
        jnp.dot(x_ref[...], w_ref[...], preferred_element_type=jnp.float32)
        + b_ref[...]
    ).astype(o_ref.dtype)


def _linear_tiledk_kernel(x_ref, w_ref, b_ref, o_ref, acc_ref):
    """K-tiled fallback for very large D (not reached at LinCLS shapes)."""
    k = pl.program_id(1)

    @pl.when(k == 0)
    def _():
        acc_ref[...] = jnp.zeros_like(acc_ref)

    acc_ref[...] += jnp.dot(
        x_ref[...], w_ref[...], preferred_element_type=jnp.float32
    )

    @pl.when(k == pl.num_programs(1) - 1)
    def _():
        o_ref[...] = (acc_ref[...] + b_ref[...]).astype(o_ref.dtype)


# ---------------------------------------------------------------------------
# Wrapper
# ---------------------------------------------------------------------------
@functools.partial(jax.jit, static_argnames=("tm", "vmem_budget_bytes"))
def lin_cls_forward(x, w_t, b, *, tm: int = 1024,
                    vmem_budget_bytes: int = 12 * 1024 * 1024):
    """y = x @ w_t + b.

    x:   (B, D) activations
    w_t: (D, O) transposed nn.Linear weight (stored this way at init time)
    b:   (O,)   bias
    """
    B, D = x.shape
    D2, O = w_t.shape
    assert D == D2 and b.size == O
    b2 = b.reshape(1, O)
    out_dtype = x.dtype
    x_isz = jnp.dtype(x.dtype).itemsize
    o_isz = jnp.dtype(out_dtype).itemsize
    w_isz = jnp.dtype(w_t.dtype).itemsize
    sub = _sublane(x.dtype)

    # Resident (non-pipelined) VMEM bytes: whole weight + bias.
    resident = D * O * w_isz + O * jnp.dtype(b2.dtype).itemsize
    # Streamed bytes per M row: double-buffered x row + double-buffered out row.
    per_row = 2 * D * x_isz + 2 * O * o_isz
    max_tm = (vmem_budget_bytes - resident) // per_row

    if max_tm >= sub:
        # ---- full-K single-pass path (always taken for LinCLS shapes) ----
        tm_eff = min(tm, int(max_tm))
        if B <= tm_eff:
            tm_eff, B_pad = B, B          # one full-extent tile, no padding
        else:
            tm_eff = max(sub, (tm_eff // sub) * sub)
            B_pad = _round_up(B, tm_eff)
        x_p = x if B_pad == B else jnp.pad(x, ((0, B_pad - B), (0, 0)))

        out = pl.pallas_call(
            _linear_fullk_kernel,
            out_shape=jax.ShapeDtypeStruct((B_pad, O), out_dtype),
            grid=(B_pad // tm_eff,),
            in_specs=[
                pl.BlockSpec((tm_eff, D), lambda i: (i, 0)),   # streamed x tile
                pl.BlockSpec((D, O), lambda i: (0, 0)),        # resident weight
                pl.BlockSpec((1, O), lambda i: (0, 0)),        # resident bias
            ],
            out_specs=pl.BlockSpec((tm_eff, O), lambda i: (i, 0)),
            compiler_params=pltpu.CompilerParams(
                dimension_semantics=("parallel",)),
        )(x_p, w_t, b2)
    else:
        # ---- K-tiled fallback: D too large to hold a (tm, D) tile in VMEM ----
        tk = 1024
        if B <= 512:
            tm_eff, B_pad = B, B
        else:
            tm_eff = _round_up(512, sub)
            B_pad = _round_up(B, tm_eff)
        D_pad = _round_up(D, tk)
        x_p = x
        if B_pad != B or D_pad != D:
            x_p = jnp.pad(x, ((0, B_pad - B), (0, D_pad - D)))
        w_p = w_t if D_pad == D else jnp.pad(w_t, ((0, D_pad - D), (0, 0)))

        out = pl.pallas_call(
            _linear_tiledk_kernel,
            out_shape=jax.ShapeDtypeStruct((B_pad, O), out_dtype),
            grid=(B_pad // tm_eff, D_pad // tk),
            in_specs=[
                pl.BlockSpec((tm_eff, tk), lambda i, k: (i, k)),
                pl.BlockSpec((tk, O), lambda i, k: (k, 0)),
                pl.BlockSpec((1, O), lambda i, k: (0, 0)),
            ],
            out_specs=pl.BlockSpec((tm_eff, O), lambda i, k: (i, 0)),
            scratch_shapes=[pltpu.VMEM((tm_eff, O), jnp.float32)],
            compiler_params=pltpu.CompilerParams(
                dimension_semantics=("parallel", "arbitrary")),
        )(x_p, w_p, b2)

    return out if B_pad == B else out[:B]


def init_lin_cls_params(key, input_dim, output_dim):
    """nn.Linear default init: U(-1/sqrt(in), 1/sqrt(in)).

    The weight is returned already transposed, (input_dim, output_dim), so the
    kernel runs a plain row-major MXU matmul with a resident weight block and
    no per-call transpose / padding of parameters.
    """
    kw, kb = jax.random.split(key)
    bound = 1.0 / jnp.sqrt(jnp.float32(input_dim))
    w = jax.random.uniform(kw, (output_dim, input_dim), jnp.float32, -bound, bound)
    b = jax.random.uniform(kb, (output_dim,), jnp.float32, -bound, bound)
    return w.T, b


if __name__ == "__main__":
    # Module defaults: input_dim=512, output_dim=8; small batch for the demo.
    batch, input_dim, output_dim = 16, 512, 8

    key = jax.random.PRNGKey(0)
    kx, kp = jax.random.split(key)
    x = jax.random.normal(kx, (batch, input_dim), jnp.float32)
    w_t, b = init_lin_cls_params(kp, input_dim, output_dim)

    y = jax.block_until_ready(lin_cls_forward(x, w_t, b))

    # Reference check in plain JAX (same math as torch.nn.Linear).
    y_ref = x @ w_t + b[None, :]
    assert y.shape == (batch, output_dim)
    assert jnp.allclose(y, y_ref, atol=1e-4, rtol=1e-4), (
        float(jnp.max(jnp.abs(y - y_ref))))

    print("KERNEL_OK")
</pallas_src>

<mosaic_0001>
module attributes {stable_mosaic.version = 11 : i64} {
  func.func @_linear_fullk_kernel(%arg0: i32, %arg1: memref<16x512xf32, #tpu.memory_space<vmem>>, %arg2: memref<512x8xf32, #tpu.memory_space<vmem>>, %arg3: memref<1x8xf32, #tpu.memory_space<vmem>>, %arg4: memref<16x8xf32, #tpu.memory_space<vmem>>) attributes {dimension_semantics = [#tpu.dimension_semantics<parallel>], iteration_bounds = array<i64: 1>, scalar_prefetch = 0 : i64, scratch_operands = 0 : i64, tpu.core_type = #tpu.core_type<tc>, window_params = [{transform_indices = @transform_0, window_bounds = array<i64: 16, 512>}, {pipeline_mode = #tpu.pipeline_mode<synchronous>, transform_indices = @transform_1, window_bounds = array<i64: 512, 8>}, {pipeline_mode = #tpu.pipeline_mode<synchronous>, transform_indices = @transform_2, window_bounds = array<i64: 1, 8>}, {transform_indices = @transform_3, window_bounds = array<i64: 16, 8>}]} {
    %c0 = arith.constant 0 : index
    %c0_0 = arith.constant 0 : index
    %0 = vector.load %arg1[%c0, %c0_0] : memref<16x512xf32, #tpu.memory_space<vmem>>, vector<16x512xf32>
    %c0_1 = arith.constant 0 : index
    %c0_2 = arith.constant 0 : index
    %1 = vector.load %arg2[%c0_1, %c0_2] : memref<512x8xf32, #tpu.memory_space<vmem>>, vector<512x8xf32>
    %cst = arith.constant dense<0.000000e+00> : vector<16x8xf32>
    %2 = tpu.matmul %0, %1, %cst {dimension_numbers = #tpu.dot_dimension_numbers<[1], [0], [0], [1], [0, 0, 1, 1], [], []>} : vector<16x512xf32>, vector<512x8xf32>, vector<16x8xf32> -> vector<16x8xf32>
    %c0_3 = arith.constant 0 : index
    %c0_4 = arith.constant 0 : index
    %3 = vector.load %arg3[%c0_3, %c0_4] : memref<1x8xf32, #tpu.memory_space<vmem>>, vector<1x8xf32>
    %4 = vector.broadcast %3 : vector<1x8xf32> to vector<16x8xf32>
    %5 = arith.addf %2, %4 : vector<16x8xf32>
    %c0_5 = arith.constant 0 : index
    %c0_6 = arith.constant 0 : index
    %6 = vector.load %arg4[%c0_5, %c0_6] : memref<16x8xf32, #tpu.memory_space<vmem>>, vector<16x8xf32>
    tpu.vector_store %arg4[%c0_5, %c0_6], %5 {strides = array<i32>} : memref<16x8xf32, #tpu.memory_space<vmem>>, vector<16x8xf32>,
    return
  }
  func.func @transform_0(%arg0: i32) -> (i32, i32) {
    %c0_i32 = arith.constant 0 : i32
    %c0_i32_0 = arith.constant 0 : i32
    return %arg0, %c0_i32 : i32, i32
  }
  func.func @transform_1(%arg0: i32) -> (i32, i32) {
    %c0_i32 = arith.constant 0 : i32
    %c0_i32_0 = arith.constant 0 : i32
    %c0_i32_1 = arith.constant 0 : i32
    return %c0_i32, %c0_i32_0 : i32, i32
  }
  func.func @transform_2(%arg0: i32) -> (i32, i32) {
    %c0_i32 = arith.constant 0 : i32
    %c0_i32_0 = arith.constant 0 : i32
    %c0_i32_1 = arith.constant 0 : i32
    return %c0_i32, %c0_i32_0 : i32, i32
  }
  func.func @transform_3(%arg0: i32) -> (i32, i32) {
    %c0_i32 = arith.constant 0 : i32
    %c0_i32_0 = arith.constant 0 : i32
    return %arg0, %c0_i32 : i32, i32
  }
}

</mosaic_0001>

<llo_original>
// kernel: lin_cls_forward.1
$region0: #{lin_cls_forward.1}
  #allocation0 [shape = 'u32[]', space=smem, size = 0x4, offset = 0x4, fixed_abs, tag = 'smem constant byte address 0x4 - core index']
  #allocation1 [shape = 'u32[144,128]{1,0:T(1,128)}', space=vmem, size = 0x12000, scoped, tag = 'internal scratch']
  %s0 = inlined_call_operand.vmem [shape: f32[16,512], index: 0, kind: input, shape index: {}]
  %s1 = inlined_call_operand.vmem [shape: f32[512,8], index: 1, kind: input, shape index: {}]
  %s2 = inlined_call_operand.vmem [shape: f32[1,8], index: 2, kind: input, shape index: {}]
  %s3 = inlined_call_operand.vmem [shape: f32[16,8], index: 3, kind: output, shape index: {}]
  %s4 = sld [smem:[#allocation0]]
  $region22: #{lin_cls_forward.1} parent=0
    _
  %s6 = ssub.s32 1, %s4
  %s7 = scalar_select 0, %s6, %s4
  // Predicated region
  $region2: #{lin_cls_forward.1} parent=0 // pred_check
    _
  $region3: #{lin_cls_forward.1} parent=0 // pred_check_branch
    %9 = sbr.rel (0) target = $region5
  $region4: #{lin_cls_forward.1} parent=0 // pred_region
    _
  $region5: #{lin_cls_forward.1} parent=0 // pred_fallthru
    _
  // Predicated region
  $region6: #{lin_cls_forward.1} parent=0 // pred_check
    _
  $region7: #{lin_cls_forward.1} parent=0 // pred_check_branch
    %11 = sbr.rel (0) target = $region9
  $region8: #{lin_cls_forward.1} parent=0 // pred_region
    _
  $region9: #{lin_cls_forward.1} parent=0 // pred_fallthru
    _
  // Predicated region
  $region10: #{lin_cls_forward.1} parent=0 // pred_check
    _
  $region11: #{lin_cls_forward.1} parent=0 // pred_check_branch
    %13 = sbr.rel (0) target = $region13
  $region12: #{lin_cls_forward.1} parent=0 // pred_region
    _
  $region13: #{lin_cls_forward.1} parent=0 // pred_fallthru
    _
  %v14 = vld [vmem:[%s0] sm:$0xff]
  %v15 = vld [vmem:[%s0 + $0x8] sm:$0xff]
  %v16 = vld [vmem:[%s0 + $0x10] sm:$0xff]
  %v17 = vld [vmem:[%s0 + $0x18] sm:$0xff]
  %v18 = vld [vmem:[%s0 + $0x20] sm:$0xff]
  %v19 = vld [vmem:[%s0 + $0x28] sm:$0xff]
  %v20 = vld [vmem:[%s0 + $0x30] sm:$0xff]
  %v21 = vld [vmem:[%s0 + $0x38] sm:$0xff]
  %v22 = vld [vmem:[%s1] sm:$0xff]
  %v23 = vld [vmem:[%s1 + $0x8] sm:$0xff]
  %v24 = vld [vmem:[%s1 + $0x10] sm:$0xff]
  %v25 = vld [vmem:[%s1 + $0x18] sm:$0xff]
  %v26 = vld [vmem:[%s1 + $0x20] sm:$0xff]
  %v27 = vld [vmem:[%s1 + $0x28] sm:$0xff]
  %v28 = vld [vmem:[%s1 + $0x30] sm:$0xff]
  %v29 = vld [vmem:[%s1 + $0x38] sm:$0xff]
  %v30 = vld [vmem:[%s1 + $0x40] sm:$0xff]
  %v31 = vld [vmem:[%s1 + $0x48] sm:$0xff]
  %v32 = vld [vmem:[%s1 + $0x50] sm:$0xff]
  %v33 = vld [vmem:[%s1 + $0x58] sm:$0xff]
  %v34 = vld [vmem:[%s1 + $0x60] sm:$0xff]
  %v35 = vld [vmem:[%s1 + $0x68] sm:$0xff]
  %v36 = vld [vmem:[%s1 + $0x70] sm:$0xff]
  %v37 = vld [vmem:[%s1 + $0x78] sm:$0xff]
  %v38 = vld [vmem:[%s1 + $0x80] sm:$0xff]
  %v39 = vld [vmem:[%s1 + $0x88] sm:$0xff]
  %v40 = vld [vmem:[%s1 + $0x90] sm:$0xff]
  %v41 = vld [vmem:[%s1 + $0x98] sm:$0xff]
  %v42 = vld [vmem:[%s1 + $0xa0] sm:$0xff]
  %v43 = vld [vmem:[%s1 + $0xa8] sm:$0xff]
  %v44 = vld [vmem:[%s1 + $0xb0] sm:$0xff]
  %v45 = vld [vmem:[%s1 + $0xb8] sm:$0xff]
  %v46 = vld [vmem:[%s1 + $0xc0] sm:$0xff]
  %v47 = vld [vmem:[%s1 + $0xc8] sm:$0xff]
  %v48 = vld [vmem:[%s1 + $0xd0] sm:$0xff]
  %v49 = vld [vmem:[%s1 + $0xd8] sm:$0xff]
  %v50 = vld [vmem:[%s1 + $0xe0] sm:$0xff]
  %v51 = vld [vmem:[%s1 + $0xe8] sm:$0xff]
  %v52 = vld [vmem:[%s1 + $0xf0] sm:$0xff]
  %v53 = vld [vmem:[%s1 + $0xf8] sm:$0xff]
  %v54 = vld [vmem:[%s1 + $0x100] sm:$0xff]
  %v55 = vld [vmem:[%s1 + $0x108] sm:$0xff]
  %v56 = vld [vmem:[%s1 + $0x110] sm:$0xff]
  %v57 = vld [vmem:[%s1 + $0x118] sm:$0xff]
  %v58 = vld [vmem:[%s1 + $0x120] sm:$0xff]
  %v59 = vld [vmem:[%s1 + $0x128] sm:$0xff]
  %v60 = vld [vmem:[%s1 + $0x130] sm:$0xff]
  %v61 = vld [vmem:[%s1 + $0x138] sm:$0xff]
  %v62 = vld [vmem:[%s1 + $0x140] sm:$0xff]
  %v63 = vld [vmem:[%s1 + $0x148] sm:$0xff]
  %v64 = vld [vmem:[%s1 + $0x150] sm:$0xff]
  %v65 = vld [vmem:[%s1 + $0x158] sm:$0xff]
  %v66 = vld [vmem:[%s1 + $0x160] sm:$0xff]
  %v67 = vld [vmem:[%s1 + $0x168] sm:$0xff]
  %v68 = vld [vmem:[%s1 + $0x170] sm:$0xff]
  %v69 = vld [vmem:[%s1 + $0x178] sm:$0xff]
  %v70 = vld [vmem:[%s1 + $0x180] sm:$0xff]
  %v71 = vld [vmem:[%s1 + $0x188] sm:$0xff]
  %v72 = vld [vmem:[%s1 + $0x190] sm:$0xff]
  %v73 = vld [vmem:[%s1 + $0x198] sm:$0xff]
  %v74 = vld [vmem:[%s1 + $0x1a0] sm:$0xff]
  %v75 = vld [vmem:[%s1 + $0x1a8] sm:$0xff]
  %v76 = vld [vmem:[%s1 + $0x1b0] sm:$0xff]
  %v77 = vld [vmem:[%s1 + $0x1b8] sm:$0xff]
  %v78 = vld [vmem:[%s1 + $0x1c0] sm:$0xff]
  %v79 = vld [vmem:[%s1 + $0x1c8] sm:$0xff]
  %v80 = vld [vmem:[%s1 + $0x1d0] sm:$0xff]
  %v81 = vld [vmem:[%s1 + $0x1d8] sm:$0xff]
  %v82 = vld [vmem:[%s1 + $0x1e0] sm:$0xff]
  %v83 = vld [vmem:[%s1 + $0x1e8] sm:$0xff]
  %v84 = vld [vmem:[%s1 + $0x1f0] sm:$0xff]
  %v85 = vld [vmem:[%s1 + $0x1f8] sm:$0xff]
  %v86 = vld [vmem:[%s2] sm:$0x1]
  %v88 = vlaneseq
  %v89 = vshrl.u32 %v88, 7
  %v90 = vsub.s32 0, %v89
  %v91 = vrot.slane %v86, %v90
  %93 = vmatprep.subr.mxu0 0.0
  %94 = vmatpush1.msra.mxu0 %v22
  %95 = vmatprep.subr.mxu0 0.0
  %96 = vmatpush1.msra.mxu0 %v23
  %97 = vmatprep.subr.mxu0 0.0
  %98 = vmatpush1.msra.mxu0 %v24
  %99 = vmatprep.subr.mxu0 0.0
  %100 = vmatpush1.msra.mxu0 %v25
  %101 = vmatprep.subr.mxu0 0.0
  %102 = vmatpush1.msra.mxu0 %v26
  %103 = vmatprep.subr.mxu0 0.0
  %104 = vmatpush1.msra.mxu0 %v27
  %105 = vmatprep.subr.mxu0 0.0
  %106 = vmatpush1.msra.mxu0 %v28
  %107 = vmatprep.subr.mxu0 0.0
  %108 = vmatpush1.msra.mxu0 %v29
  %109 = vmatprep.subr.mxu0 0.0
  %110 = vmatpush1.msra.mxu0 %v30
  %111 = vmatprep.subr.mxu0 0.0
  %112 = vmatpush1.msra.mxu0 %v31
  %113 = vmatprep.subr.mxu0 0.0
  %114 = vmatpush1.msra.mxu0 %v32
  %115 = vmatprep.subr.mxu0 0.0
  %116 = vmatpush1.msra.mxu0 %v33
  %117 = vmatprep.subr.mxu0 0.0
  %118 = vmatpush1.msra.mxu0 %v34
  %119 = vmatprep.subr.mxu0 0.0
  %120 = vmatpush1.msra.mxu0 %v35
  %121 = vmatprep.subr.mxu0 0.0
  %122 = vmatpush1.msra.mxu0 %v36
  %123 = vmatprep.subr.mxu0 0.0
  %124 = vmatpush1.msra.mxu0 %v37
  %125 = vmatprep.subr.mxu0 0.0
  %126 = vmatpush1.msra.mxu0 %v38
  %127 = vmatprep.subr.mxu0 0.0
  %128 = vmatpush1.msra.mxu0 %v39
  %129 = vmatprep.subr.mxu0 0.0
  %130 = vmatpush1.msra.mxu0 %v40
  %131 = vmatprep.subr.mxu0 0.0
  %132 = vmatpush1.msra.mxu0 %v41
  %133 = vmatprep.subr.mxu0 0.0
  %134 = vmatpush1.msra.mxu0 %v42
  %135 = vmatprep.subr.mxu0 0.0
  %136 = vmatpush1.msra.mxu0 %v43
  %137 = vmatprep.subr.mxu0 0.0
  %138 = vmatpush1.msra.mxu0 %v44
  %139 = vmatprep.subr.mxu0 0.0
  %140 = vmatpush1.msra.mxu0 %v45
  %141 = vmatprep.subr.mxu0 0.0
  %142 = vmatpush1.msra.mxu0 %v46
  %143 = vmatprep.subr.mxu0 0.0
  %144 = vmatpush1.msra.mxu0 %v47
  %145 = vmatprep.subr.mxu0 0.0
  %146 = vmatpush1.msra.mxu0 %v48
  %147 = vmatprep.subr.mxu0 0.0
  %148 = vmatpush1.msra.mxu0 %v49
  %149 = vmatprep.subr.mxu0 0.0
  %150 = vmatpush1.msra.mxu0 %v50
  %151 = vmatprep.subr.mxu0 0.0
  %152 = vmatpush1.msra.mxu0 %v51
  %153 = vmatprep.subr.mxu0 0.0
  %154 = vmatpush1.msra.mxu0 %v52
  %155 = vmatprep.subr.mxu0 0.0
  %156 = vmatpush1.msra.mxu0 %v53
  %157 = vmatprep.mubr.f32.mxu0 %v15
  %158 = vmatmul.mubr.f32.gmra.mrb[0].mxu0 %v14
  %v159 = vpop.f32.mrb[0].mxu0
  %v160 = vadd.f32 %v91, %v159
  %v161 = vpop.f32.mrb[0].mxu0
  %162 = vmatprep.mubr.f32.mxu0 %v19
  %163 = vmatmul.mubr.f32.gmra.mrb[0].mxu0 %v18
  %v164 = vpop.f32.mrb[0].mxu0
  %v165 = vadd.f32 %v91, %v164
  %v166 = vpop.f32.mrb[0].mxu0
  %167 = vdwg.mxu0
  %168 = vmatprep.subr.mxu0 0.0
  %169 = vmatpush1.msra.mxu0 %v54
  %170 = vmatprep.subr.mxu0 0.0
  %171 = vmatpush1.msra.mxu0 %v55
  %172 = vmatprep.subr.mxu0 0.0
  %173 = vmatpush1.msra.mxu0 %v56
  %174 = vmatprep.subr.mxu0 0.0
  %175 = vmatpush1.msra.mxu0 %v57
  %176 = vmatprep.subr.mxu0 0.0
  %177 = vmatpush1.msra.mxu0 %v58
  %178 = vmatprep.subr.mxu0 0.0
  %179 = vmatpush1.msra.mxu0 %v59
  %180 = vmatprep.subr.mxu0 0.0
  %181 = vmatpush1.msra.mxu0 %v60
  %182 = vmatprep.subr.mxu0 0.0
  %183 = vmatpush1.msra.mxu0 %v61
  %184 = vmatprep.subr.mxu0 0.0
  %185 = vmatpush1.msra.mxu0 %v62
  %186 = vmatprep.subr.mxu0 0.0
  %187 = vmatpush1.msra.mxu0 %v63
  %188 = vmatprep.subr.mxu0 0.0
  %189 = vmatpush1.msra.mxu0 %v64
  %190 = vmatprep.subr.mxu0 0.0
  %191 = vmatpush1.msra.mxu0 %v65
  %192 = vmatprep.subr.mxu0 0.0
  %193 = vmatpush1.msra.mxu0 %v66
  %194 = vmatprep.subr.mxu0 0.0
  %195 = vmatpush1.msra.mxu0 %v67
  %196 = vmatprep.subr.mxu0 0.0
  %197 = vmatpush1.msra.mxu0 %v68
  %198 = vmatprep.subr.mxu0 0.0
  %199 = vmatpush1.msra.mxu0 %v69
  %200 = vmatprep.subr.mxu0 0.0
  %201 = vmatpush1.msra.mxu0 %v70
  %202 = vmatprep.subr.mxu0 0.0
  %203 = vmatpush1.msra.mxu0 %v71
  %204 = vmatprep.subr.mxu0 0.0
  %205 = vmatpush1.msra.mxu0 %v72
  %206 = vmatprep.subr.mxu0 0.0
  %207 = vmatpush1.msra.mxu0 %v73
  %208 = vmatprep.subr.mxu0 0.0
  %209 = vmatpush1.msra.mxu0 %v74
  %210 = vmatprep.subr.mxu0 0.0
  %211 = vmatpush1.msra.mxu0 %v75
  %212 = vmatprep.subr.mxu0 0.0
  %213 = vmatpush1.msra.mxu0 %v76
  %214 = vmatprep.subr.mxu0 0.0
  %215 = vmatpush1.msra.mxu0 %v77
  %216 = vmatprep.subr.mxu0 0.0
  %217 = vmatpush1.msra.mxu0 %v78
  %218 = vmatprep.subr.mxu0 0.0
  %219 = vmatpush1.msra.mxu0 %v79
  %220 = vmatprep.subr.mxu0 0.0
  %221 = vmatpush1.msra.mxu0 %v80
  %222 = vmatprep.subr.mxu0 0.0
  %223 = vmatpush1.msra.mxu0 %v81
  %224 = vmatprep.subr.mxu0 0.0
  %225 = vmatpush1.msra.mxu0 %v82
  %226 = vmatprep.subr.mxu0 0.0
  %227 = vmatpush1.msra.mxu0 %v83
  %228 = vmatprep.subr.mxu0 0.0
  %229 = vmatpush1.msra.mxu0 %v84
  %230 = vmatprep.subr.mxu0 0.0
  %231 = vmatpush1.msra.mxu0 %v85
  %232 = vmatprep.mubr.f32.mxu0 %v17
  %233 = vmatmul.mubr.f32.gmra.mrb[0].mxu0 %v16
  %v234 = vpop.f32.mrb[0].mxu0
  %v235 = vadd.f32 %v160, %v234
  %v236 = vpop.f32.mrb[0].mxu0
  %237 = vmatprep.mubr.f32.mxu0 %v21
  %238 = vmatmul.mubr.f32.gmra.mrb[0].mxu0 %v20
  %v239 = vpop.f32.mrb[0].mxu0
  %v240 = vadd.f32 %v165, %v239
  %v241 = vpop.f32.mrb[0].mxu0
  %242 = vdwg.mxu0
  %vm243 = vcmask 64512
  %244 = vst.msk [vmem:[%s3] sm:$0xff] %vm243, %v235
  %245 = vst.msk [vmem:[%s3 + $0x8] sm:$0xff] %vm243, %v240
  // Predicated region
  $region14: #{lin_cls_forward.1} parent=0 // pred_check
    _
  $region15: #{lin_cls_forward.1} parent=0 // pred_check_branch
    %247 = sbr.rel (0) target = $region17
  $region16: #{lin_cls_forward.1} parent=0 // pred_region
    _
  $region17: #{lin_cls_forward.1} parent=0 // pred_fallthru
    _
  // Predicated region
  $region18: #{lin_cls_forward.1} parent=0 // pred_check
    _
  $region19: #{lin_cls_forward.1} parent=0 // pred_check_branch
    %249 = sbr.rel (0) target = $region21
  $region20: #{lin_cls_forward.1} parent=0 // pred_region
    _
  $region21: #{lin_cls_forward.1} parent=0 // pred_fallthru
    _

</llo_original>
